<compile_context>
chip_gen: v5e
topology: v5e:2x2
jax: 0.10.0
libtpu: 0.0.40
codegen_flags: <defaults>
</compile_context>

<pallas_src>
import functools

import jax
import jax.numpy as jnp
from jax.experimental import pallas as pl
from jax.experimental.pallas import tpu as pltpu

POOL = 4          # MaxPool2d(4) kernel == stride
OUT_H = 32        # F.interpolate(size=(32, 32), mode='nearest')
OUT_W = 32


# --------------------------------------------------------------------------- #
# Kernel
# --------------------------------------------------------------------------- #
def _blur_kernel(x_ref, sel_ref, o_ref, *, img_w, precision):
    """One block of folded rows.

    x_ref  : (rows, L)   L = G*img_w lanes; each row holds G consecutive image
             rows of one channel side-by-side (G a multiple of POOL).
    sel_ref: (L, Fo)     constant 0/1 selection matrix (resident, DMA'd once).
    o_ref  : (rows, Fo)  Fo = (G/POOL)*rh*32 lanes; each row holds, side by
             side, every upsampled output row produced by this input row.
    """
    v = x_ref[...]
    L = v.shape[-1]

    # ---- MaxPool2d(4, stride=4): XLU rolls + VPU max, no lane reshapes ----
    # H direction: the 4 image rows of each pooling window sit at lane offsets
    # 0, W, 2W, 3W inside the window's 4W-lane segment.  roll(shift=L-d) puts
    # x[j+d] at lane j, so a 2-level max tree covers the 4-row window.
    t = jnp.maximum(v, pltpu.roll(v, shift=L - 2 * img_w, axis=1))
    m = jnp.maximum(t, pltpu.roll(t, shift=L - img_w, axis=1))
    # W direction: window of 4 adjacent lanes.
    t = jnp.maximum(m, pltpu.roll(m, shift=L - 2, axis=1))
    p = jnp.maximum(t, pltpu.roll(t, shift=L - 1, axis=1))
    # The pooled value for (window b, pooled column jw) now sits at lane
    # b*4*W + jw*4; lanes in between hold junk from wrapped rolls, which the
    # selection matrix multiplies by zero.

    # ---- nearest upsample + row-major flatten: one selection matmul (MXU) ---
    out = jax.lax.dot_general(
        p, sel_ref[...],
        dimension_numbers=(((1,), (0,)), ((), ())),
        preferred_element_type=jnp.float32,
        precision=precision)
    o_ref[...] = out.astype(o_ref.dtype)


# --------------------------------------------------------------------------- #
# Generation-aware sizing helpers
# --------------------------------------------------------------------------- #
def _vmem_capacity_bytes():
    try:
        info = pltpu.get_tpu_info()
        cap = getattr(info, "vmem_capacity_bytes", None)
        if cap:
            return int(cap)
    except Exception:
        pass
    return 64 << 20           # v7x per-TensorCore VMEM (the smallest) fallback


def _num_tensorcores_per_chip():
    # v7x exposes 2 TensorCores per chip; v5e / v6e have 1.
    try:
        kind = jax.devices()[0].device_kind.lower()
    except Exception:
        return 1
    return 2 if "7" in kind else 1


def _pick_fold(H, W, rh):
    """Image rows folded side-by-side into one lane-dense row.

    Must be a multiple of POOL (pool windows may not straddle folded rows) and
    divide H; grown until both the input row (G*W lanes) and the output row
    ((G/POOL)*rh*32 lanes) are multiples of 128 whenever possible.
    """
    def dense(g):
        return (g * W) % 128 == 0 and ((g // POOL) * rh * OUT_W) % 128 == 0

    g = POOL
    while not dense(g) and g * 2 <= H and H % (g * 2) == 0:
        g *= 2
    # TODO(synk): for images with fewer than 128 pixels total (e.g. 8x8) the
    # folded row stays narrower than 128 lanes; acceptable for such tiny inputs.
    return g


def _pick_row_block(n_rows, bytes_per_row, sel_bytes, itemsize, vmem_cap):
    """Rows per grid block: generation-aware VMEM budget + TensorCore count."""
    # Per-block working-set budget: ~12 MiB on 128-MiB-VMEM chips (v5e/v6e),
    # ~10 MiB on v7x (64 MiB per core).  bytes_per_row already accounts for the
    # double-buffered input/output, pooling temporaries and the f32 matmul
    # accumulator; the resident selection matrix is charged separately.
    budget = (12 << 20) if vmem_cap >= (100 << 20) else (10 << 20)
    align = max(8, 32 // itemsize)             # sublane tile: 8 f32, 16 bf16
    avail = max(budget - 2 * sel_bytes, bytes_per_row * align)
    max_rows = max(align, (avail // bytes_per_row) // align * align)

    # v5e/v6e (1 TC): a single block is best when it fits (no pointless split).
    # v7x (2 TC): >= 4 balanced blocks so both cores run and the DMA pipeline
    # has >= 2 steps of depth per core.
    min_blocks = 1
    if _num_tensorcores_per_chip() >= 2 and n_rows >= 8 * align:
        min_blocks = 4

    n_blocks = max(-(-n_rows // max_rows), min_blocks)
    r_blk = -(-n_rows // n_blocks)             # balanced blocks
    r_blk = -(-r_blk // align) * align         # sublane-aligned block rows
    if r_blk >= n_rows:
        r_blk = n_rows                         # single full-extent block
    return r_blk


# --------------------------------------------------------------------------- #
# Wrapper
# --------------------------------------------------------------------------- #
def blur_transform_pallas(x, *, compute_dtype=None):
    """MaxPool2d(4) + nearest-neighbour upsample back to (32, 32).

    x: (C, H, W) or (N, C, H, W) with H, W divisible by 4 and 32 divisible by
    the pooled sizes (true for the canonical <=128 square inputs), so PyTorch
    'nearest' is an exact integer repeat.  compute_dtype=jnp.bfloat16 halves
    HBM reads if the augmentation consumer tolerates it (optional).
    """
    squeeze = x.ndim == 3
    xb = x[None] if squeeze else x
    if compute_dtype is not None and xb.dtype != compute_dtype:
        xb = xb.astype(compute_dtype)
    N, C, H, W = xb.shape
    assert H % POOL == 0 and W % POOL == 0
    Hp, Wp = H // POOL, W // POOL
    assert OUT_H % Hp == 0 and OUT_W % Wp == 0, \
        "nearest upsample implemented as exact integer repeat"
    # TODO(synk): non-integer-ratio nearest (32 % (H//4) != 0) would need a
    # floor-index gather; PyTorch allows it but this fast path does not.
    rh, rw = OUT_H // Hp, OUT_W // Wp

    ctot = N * C
    G = _pick_fold(H, W, rh)                   # image rows folded per lane row
    WIN = G // POOL                            # pool windows per folded row
    L = G * W                                  # input lanes per folded row
    Fo = WIN * rh * OUT_W                      # output lanes per folded row
    n_rows = ctot * (H // G)

    # Lane-dense folded layout: free row-major reshape in HBM.
    xf = xb.reshape(n_rows, L)

    # Constant 0/1 selection matrix (hoisted out of the kernel; DMA'd once and
    # kept resident via a constant block index):  out[r, q] = pooled[r, src(q)].
    q = jnp.arange(Fo, dtype=jnp.int32)
    b = q // (rh * OUT_W)                      # pooling window inside the row
    ow = q % OUT_W                             # output column
    src = b * (POOL * W) + (ow // rw) * POOL   # lane holding the pooled value
    sel = (jnp.arange(L, dtype=jnp.int32)[:, None] == src[None, :]).astype(xf.dtype)

    # Exact selection for f32 needs HIGHEST (multi-pass bf16 on the MXU); bf16
    # inputs are already exact with a single default-precision pass.
    precision = (jax.lax.Precision.HIGHEST if xf.dtype == jnp.float32
                 else jax.lax.Precision.DEFAULT)

    isz = xf.dtype.itemsize
    # double-buffered in/out + two pooling temporaries + f32 matmul accumulator
    bytes_per_row = 4 * L * isz + Fo * (4 + 2 * isz)
    sel_bytes = L * Fo * isz
    cap = _vmem_capacity_bytes()
    r_blk = _pick_row_block(n_rows, bytes_per_row, sel_bytes, isz, cap)
    n_blocks = pl.cdiv(n_rows, r_blk)
    need = 2 * sel_bytes + bytes_per_row * r_blk
    vmem_limit = int(min(cap * 3 // 4, max(2 * need, 16 << 20)))

    kernel = functools.partial(_blur_kernel, img_w=W, precision=precision)
    out_flat = pl.pallas_call(
        kernel,
        out_shape=jax.ShapeDtypeStruct((n_rows, Fo), xf.dtype),
        grid=(n_blocks,),
        in_specs=[pl.BlockSpec((r_blk, L), lambda i: (i, 0)),
                  pl.BlockSpec((L, Fo), lambda i: (0, 0))],   # resident constant
        out_specs=pl.BlockSpec((r_blk, Fo), lambda i: (i, 0)),
        compiler_params=pltpu.CompilerParams(
            dimension_semantics=("parallel",),
            vmem_limit_bytes=vmem_limit),
    )(xf, sel)

    # (n_rows, Fo) is bit-identical in row-major order to (N, C, 32, 32).
    out = out_flat.reshape(N, C, OUT_H, OUT_W)
    return out[0] if squeeze else out


class BlurTransform:
    """JAX/Pallas port of the PyTorch BlurTransform module (no parameters)."""

    def __init__(self, start_epoch, end_epoch):
        self.start = start_epoch
        self.end = end_epoch
        self.current_epoch = 0

    def set_epoch(self, epoch):
        self.current_epoch = epoch

    def __call__(self, x):
        if self.start <= self.current_epoch < self.end:
            return blur_transform_pallas(x)
        return x


def _reference(x):
    """Pure-JAX reference: maxpool(4) + PyTorch-style nearest upsample to 32x32."""
    squeeze = x.ndim == 3
    xb = x[None] if squeeze else x
    N, C, H, W = xb.shape
    Hp, Wp = H // POOL, W // POOL
    pooled = jnp.max(xb.reshape(N, C, Hp, POOL, Wp, POOL), axis=(3, 5))
    ih = (jnp.arange(OUT_H) * Hp) // OUT_H      # PyTorch nearest: floor index
    iw = (jnp.arange(OUT_W) * Wp) // OUT_W
    out = pooled[:, :, ih][:, :, :, iw]
    return out[0] if squeeze else out


if __name__ == "__main__":
    key = jax.random.PRNGKey(0)
    k1, k2, k3 = jax.random.split(key, 3)

    module = BlurTransform(start_epoch=0, end_epoch=10)
    module.set_epoch(3)                         # inside [start, end) -> blur

    # 1) Single CIFAR-style f32 image (true f32 data: exercises the HIGHEST-
    #    precision exact-selection path).
    x1 = jax.random.normal(k1, (3, 32, 32), jnp.float32)
    out1 = jax.block_until_ready(module(x1))
    assert out1.shape == (3, OUT_H, OUT_W), out1.shape
    assert jnp.allclose(out1, _reference(x1), rtol=1e-4, atol=1e-4), \
        "f32 single-image mismatch"

    # 2) Small f32 batch (exercises the G=8 lane-dense fold for 16x16 inputs).
    x2 = jax.random.normal(k2, (2, 4, 16, 16), jnp.float32)
    out2 = jax.block_until_ready(blur_transform_pallas(x2))
    assert out2.shape == (2, 4, OUT_H, OUT_W), out2.shape
    assert jnp.allclose(out2, _reference(x2), rtol=1e-4, atol=1e-4), \
        "f32 batched mismatch"

    # 3) bf16 batch (single-pass default-precision MXU selection).
    x3 = jax.random.normal(k3, (2, 3, 32, 32), jnp.float32).astype(jnp.bfloat16)
    out3 = jax.block_until_ready(blur_transform_pallas(x3))
    ref3 = _reference(x3)
    assert out3.dtype == jnp.bfloat16 and out3.shape == (2, 3, OUT_H, OUT_W)
    assert jnp.allclose(out3.astype(jnp.float32), ref3.astype(jnp.float32),
                        rtol=1e-2, atol=1e-2), "bf16 batched mismatch"

    # 4) Outside the epoch window -> identity passthrough.
    module.set_epoch(20)
    passthrough = jax.block_until_ready(module(x1))
    assert passthrough.shape == x1.shape and jnp.array_equal(passthrough, x1)

    print("KERNEL_OK")
</pallas_src>

<mosaic_0001>
module attributes {stable_mosaic.version = 11 : i64} {
  func.func @_blur_kernel(%arg0: i32, %arg1: memref<24x128xf32, #tpu.memory_space<vmem>>, %arg2: memref<128x128xf32, #tpu.memory_space<vmem>>, %arg3: memref<24x128xf32, #tpu.memory_space<vmem>>) attributes {dimension_semantics = [#tpu.dimension_semantics<parallel>], iteration_bounds = array<i64: 1>, scalar_prefetch = 0 : i64, scratch_operands = 0 : i64, tpu.core_type = #tpu.core_type<tc>, window_params = [{transform_indices = @transform_0, window_bounds = array<i64: 24, 128>}, {pipeline_mode = #tpu.pipeline_mode<synchronous>, transform_indices = @transform_1, window_bounds = array<i64: 128, 128>}, {transform_indices = @transform_2, window_bounds = array<i64: 24, 128>}]} {
    %c0 = arith.constant 0 : index
    %c0_0 = arith.constant 0 : index
    %0 = vector.load %arg1[%c0, %c0_0] : memref<24x128xf32, #tpu.memory_space<vmem>>, vector<24x128xf32>
    %c64_i32 = arith.constant 64 : i32
    %1 = tpu.dynamic_rotate %0 by %c64_i32 dim 1 : vector<24x128xf32>, i32 -> vector<24x128xf32>
    %2 = arith.maximumf %0, %1 : vector<24x128xf32>
    %c96_i32 = arith.constant 96 : i32
    %3 = tpu.dynamic_rotate %2 by %c96_i32 dim 1 : vector<24x128xf32>, i32 -> vector<24x128xf32>
    %4 = arith.maximumf %2, %3 : vector<24x128xf32>
    %c126_i32 = arith.constant 126 : i32
    %5 = tpu.dynamic_rotate %4 by %c126_i32 dim 1 : vector<24x128xf32>, i32 -> vector<24x128xf32>
    %6 = arith.maximumf %4, %5 : vector<24x128xf32>
    %c127_i32 = arith.constant 127 : i32
    %7 = tpu.dynamic_rotate %6 by %c127_i32 dim 1 : vector<24x128xf32>, i32 -> vector<24x128xf32>
    %8 = arith.maximumf %6, %7 : vector<24x128xf32>
    %c0_1 = arith.constant 0 : index
    %c0_2 = arith.constant 0 : index
    %9 = vector.load %arg2[%c0_1, %c0_2] : memref<128x128xf32, #tpu.memory_space<vmem>>, vector<128x128xf32>
    %cst = arith.constant dense<0.000000e+00> : vector<24x128xf32>
    %10 = tpu.matmul %8, %9, %cst {dimension_numbers = #tpu.dot_dimension_numbers<[1], [0], [0], [1], [0, 0, 1, 1], [], []>, precision = #tpu.contract_precision<fp32>} : vector<24x128xf32>, vector<128x128xf32>, vector<24x128xf32> -> vector<24x128xf32>
    %c0_3 = arith.constant 0 : index
    %c0_4 = arith.constant 0 : index
    %11 = vector.load %arg3[%c0_3, %c0_4] : memref<24x128xf32, #tpu.memory_space<vmem>>, vector<24x128xf32>
    tpu.vector_store %arg3[%c0_3, %c0_4], %10 {strides = array<i32>} : memref<24x128xf32, #tpu.memory_space<vmem>>, vector<24x128xf32>,
    return
  }
  func.func @transform_0(%arg0: i32) -> (i32, i32) {
    %c0_i32 = arith.constant 0 : i32
    %c0_i32_0 = arith.constant 0 : i32
    return %arg0, %c0_i32 : i32, i32
  }
  func.func @transform_1(%arg0: i32) -> (i32, i32) {
    %c0_i32 = arith.constant 0 : i32
    %c0_i32_0 = arith.constant 0 : i32
    %c0_i32_1 = arith.constant 0 : i32
    return %c0_i32, %c0_i32_0 : i32, i32
  }
  func.func @transform_2(%arg0: i32) -> (i32, i32) {
    %c0_i32 = arith.constant 0 : i32
    %c0_i32_0 = arith.constant 0 : i32
    return %arg0, %c0_i32 : i32, i32
  }
}

</mosaic_0001>

<llo_original>
// kernel: tpu_custom_call.1
$region0: #{tpu_custom_call.1}
  #allocation0 [shape = 'u32[]', space=smem, size = 0x4, offset = 0x4, fixed_abs, tag = 'smem constant byte address 0x4 - core index']
  #allocation1 [shape = 'u32[72,128]{1,0:T(1,128)}', space=vmem, size = 0x9000, scoped, tag = 'internal scratch']
  %s0 = inlined_call_operand.hbm [shape: f32[24,128], index: 0, kind: input, shape index: {}]
  %s1 = inlined_call_operand.hbm [shape: f32[128,128], index: 1, kind: input, shape index: {}]
  %s2 = inlined_call_operand.hbm [shape: f32[24,128], index: 2, kind: output, shape index: {}]
  %s3 = sld [smem:[#allocation0]]
  $region26: #{tpu_custom_call.1} parent=0
    _
  %s5 = ssub.s32 1, %s3
  %s6 = scalar_select 0, %s5, %s3
  $region1: #{tpu_custom_call.1} parent=0
    #allocation2 [shape = 'u8[12288]{0}', space=vmem, size = 0x3000, scoped, tag = 'input window, operand 0, single buffered']
    #allocation3 [shape = 's32[1]{0}', space=sflag, size = 0x4, scoped, tag = 'scoped memory for tpu_custom_call.1']
    #allocation4 [shape = 's32[1]{0}', space=sflag, size = 0x4, scoped, tag = 'scoped memory for tpu_custom_call.1']
    #allocation5 [shape = 'u8[65536]{0}', space=vmem, size = 0x10000, scoped, tag = 'input window, operand 1, single buffered']
    #allocation6 [shape = 's32[1]{0}', space=sflag, size = 0x4, scoped, tag = 'scoped memory for tpu_custom_call.1']
    #allocation7 [shape = 'u8[12288]{0}', space=vmem, size = 0x3000, scoped, tag = 'output window, operand 0, single buffered']
    %7 = vsyncpa [#allocation3], 0
    %8 = vsyncpa [#allocation6], 0
    %9 = vsyncpa [#allocation4], 0
    // Predicated region
    $region2: #{tpu_custom_call.1} parent=1 // pred_check
      _
    $region3: #{tpu_custom_call.1} parent=1 // pred_check_branch
      %11 = sbr.rel (0) target = $region5
    $region4: #{tpu_custom_call.1} parent=1 // pred_region
      %13 = vsyncadd [#allocation3], 0
      %s14 = sshll.u32 %s0, 4
      %s15 = int_to_ptr.hbm [resolvable:$true] %s14
      %s16 = sshll.u32 [#allocation2], 4
      %s17 = int_to_ptr.vmem [resolvable:$true] %s16
      %22 = dma.hbm_to_vmem [thread:$0]  %s15, 384, %s17, [#allocation3], 128, 128, 8
    $region5: #{tpu_custom_call.1} parent=1 // pred_fallthru
      _
    // Predicated region
    $region6: #{tpu_custom_call.1} parent=1 // pred_check
      _
    $region7: #{tpu_custom_call.1} parent=1 // pred_check_branch
      %24 = sbr.rel (0) target = $region9
    $region8: #{tpu_custom_call.1} parent=1 // pred_region
      %26 = vsyncadd [#allocation6], 0
      %s27 = sshll.u32 %s1, 4
      %s28 = int_to_ptr.hbm [resolvable:$true] %s27
      %s29 = sshll.u32 [#allocation5], 4
      %s30 = int_to_ptr.vmem [resolvable:$true] %s29
      %35 = dma.hbm_to_vmem [thread:$0]  %s28, 2048, %s30, [#allocation6], 128, 128, 8
    $region9: #{tpu_custom_call.1} parent=1 // pred_fallthru
      _
    // Predicated region
    $region10: #{tpu_custom_call.1} parent=1 // pred_check
      _
    $region11: #{tpu_custom_call.1} parent=1 // pred_check_branch
      %37 = sbr.rel (0) target = $region13
    $region12: #{tpu_custom_call.1} parent=1 // pred_region
      %39 = dma.done [#allocation3], 384
    $region13: #{tpu_custom_call.1} parent=1 // pred_fallthru
      _
    // Predicated region
    $region14: #{tpu_custom_call.1} parent=1 // pred_check
      _
    $region15: #{tpu_custom_call.1} parent=1 // pred_check_branch
      %41 = sbr.rel (0) target = $region17
    $region16: #{tpu_custom_call.1} parent=1 // pred_region
      %43 = dma.done [#allocation6], 2048
    $region17: #{tpu_custom_call.1} parent=1 // pred_fallthru
      _
    %v44 = vld [vmem:[#allocation2] sm:$0xff]
    %v45 = vld [vmem:[#allocation2 + $0x8] sm:$0xff]
    %v46 = vld [vmem:[#allocation2 + $0x10] sm:$0xff]
    %47 = vrot.lane.b32.xlu0 %v44, 64
    %v48 = vpop.permute.xlu0 %47
    %49 = vrot.lane.b32.xlu0 %v45, 64
    %v50 = vpop.permute.xlu0 %49
    %51 = vrot.lane.b32.xlu0 %v46, 64
    %v52 = vpop.permute.xlu0 %51
    %v53 = vmax.f32 %v44, %v48
    %v54 = vmax.f32 %v45, %v50
    %v55 = vmax.f32 %v46, %v52
    %56 = vrot.lane.b32.xlu0 %v53, 96
    %v57 = vpop.permute.xlu0 %56
    %58 = vrot.lane.b32.xlu0 %v54, 96
    %v59 = vpop.permute.xlu0 %58
    %60 = vrot.lane.b32.xlu0 %v55, 96
    %v61 = vpop.permute.xlu0 %60
    %v62 = vmax.f32 %v53, %v57
    %v63 = vmax.f32 %v54, %v59
    %v64 = vmax.f32 %v55, %v61
    %65 = vrot.lane.b32.xlu0 %v62, 126
    %v66 = vpop.permute.xlu0 %65
    %67 = vrot.lane.b32.xlu0 %v63, 126
    %v68 = vpop.permute.xlu0 %67
    %69 = vrot.lane.b32.xlu0 %v64, 126
    %v70 = vpop.permute.xlu0 %69
    %v71 = vmax.f32 %v62, %v66
    %v72 = vmax.f32 %v63, %v68
    %v73 = vmax.f32 %v64, %v70
    %74 = vrot.lane.b32.xlu0 %v71, 127
    %v75 = vpop.permute.xlu0 %74
    %76 = vrot.lane.b32.xlu0 %v72, 127
    %v77 = vpop.permute.xlu0 %76
    %78 = vrot.lane.b32.xlu0 %v73, 127
    %v79 = vpop.permute.xlu0 %78
    %v80 = vmax.f32 %v71, %v75
    %v81 = vmax.f32 %v72, %v77
    %v82 = vmax.f32 %v73, %v79
    %v83 = vld [vmem:[#allocation5] sm:$0xff]
    %v84 = vld [vmem:[#allocation5 + $0x8] sm:$0xff]
    %v85 = vld [vmem:[#allocation5 + $0x10] sm:$0xff]
    %v86 = vld [vmem:[#allocation5 + $0x18] sm:$0xff]
    %v87 = vld [vmem:[#allocation5 + $0x20] sm:$0xff]
    %v88 = vld [vmem:[#allocation5 + $0x28] sm:$0xff]
    %v89 = vld [vmem:[#allocation5 + $0x30] sm:$0xff]
    %v90 = vld [vmem:[#allocation5 + $0x38] sm:$0xff]
    %v91 = vld [vmem:[#allocation5 + $0x40] sm:$0xff]
    %v92 = vld [vmem:[#allocation5 + $0x48] sm:$0xff]
    %v93 = vld [vmem:[#allocation5 + $0x50] sm:$0xff]
    %v94 = vld [vmem:[#allocation5 + $0x58] sm:$0xff]
    %v95 = vld [vmem:[#allocation5 + $0x60] sm:$0xff]
    %v96 = vld [vmem:[#allocation5 + $0x68] sm:$0xff]
    %v97 = vld [vmem:[#allocation5 + $0x70] sm:$0xff]
    %v98 = vld [vmem:[#allocation5 + $0x78] sm:$0xff]
    %v99 = vand.u32 %v98, 4294901760
    %100 = vmatpush.msra.mxu0 %v99
    %v101 = vand.u32 %v97, 4294901760
    %102 = vmatpush.msra.mxu0 %v101
    %v103 = vand.u32 %v96, 4294901760
    %104 = vmatpush.msra.mxu0 %v103
    %v105 = vand.u32 %v95, 4294901760
    %106 = vmatpush.msra.mxu0 %v105
    %v107 = vand.u32 %v94, 4294901760
    %108 = vmatpush.msra.mxu0 %v107
    %v109 = vand.u32 %v93, 4294901760
    %110 = vmatpush.msra.mxu0 %v109
    %v111 = vand.u32 %v92, 4294901760
    %112 = vmatpush.msra.mxu0 %v111
    %v113 = vand.u32 %v91, 4294901760
    %114 = vmatpush.msra.mxu0 %v113
    %v115 = vand.u32 %v90, 4294901760
    %116 = vmatpush.msra.mxu0 %v115
    %v117 = vand.u32 %v89, 4294901760
    %118 = vmatpush.msra.mxu0 %v117
    %v119 = vand.u32 %v88, 4294901760
    %120 = vmatpush.msra.mxu0 %v119
    %v121 = vand.u32 %v87, 4294901760
    %122 = vmatpush.msra.mxu0 %v121
    %v123 = vand.u32 %v86, 4294901760
    %124 = vmatpush.msra.mxu0 %v123
    %v125 = vand.u32 %v85, 4294901760
    %126 = vmatpush.msra.mxu0 %v125
    %v127 = vand.u32 %v84, 4294901760
    %128 = vmatpush.msra.mxu0 %v127
    %v129 = vand.u32 %v83, 4294901760
    %130 = vmatpush.msra.mxu0 %v129
    %v131 = vand.u32 %v80, 4294901760
    %v132 = vsub.f32 %v80, %v131
    %v133 = vand.u32 %v132, 4294901760
    %v134 = vsub.f32 %v132, %v133
    %v135 = vand.u32 %v134, 4294901760
    %136 = vmatmul.f32.gmra.mxu0 %v135
    %v137 = vpop.f32.mrf.mxu0
    %v138 = vadd.f32 0.0, %v137
    %v139 = vand.u32 %v81, 4294901760
    %v140 = vsub.f32 %v81, %v139
    %v141 = vand.u32 %v140, 4294901760
    %v142 = vsub.f32 %v140, %v141
    %v143 = vand.u32 %v142, 4294901760
    %144 = vmatmul.f32.gmra.mxu0 %v143
    %v145 = vpop.f32.mrf.mxu0
    %v146 = vadd.f32 0.0, %v145
    %v147 = vand.u32 %v82, 4294901760
    %v148 = vsub.f32 %v82, %v147
    %v149 = vand.u32 %v148, 4294901760
    %v150 = vsub.f32 %v148, %v149
    %v151 = vand.u32 %v150, 4294901760
    %152 = vmatmul.f32.gmra.mxu0 %v151
    %v153 = vpop.f32.mrf.mxu0
    %v154 = vadd.f32 0.0, %v153
    %155 = vdwg.mxu0
    %v156 = vand.u32 %v98, 4294901760
    %v157 = vsub.f32 %v98, %v156
    %v158 = vand.u32 %v157, 4294901760
    %v159 = vsub.f32 %v157, %v158
    %v160 = vand.u32 %v159, 4294901760
    %161 = vmatpush.msra.mxu0 %v160
    %v162 = vand.u32 %v97, 4294901760
    %v163 = vsub.f32 %v97, %v162
    %v164 = vand.u32 %v163, 4294901760
    %v165 = vsub.f32 %v163, %v164
    %v166 = vand.u32 %v165, 4294901760
    %167 = vmatpush.msra.mxu0 %v166
    %v168 = vand.u32 %v96, 4294901760
    %v169 = vsub.f32 %v96, %v168
    %v170 = vand.u32 %v169, 4294901760
    %v171 = vsub.f32 %v169, %v170
    %v172 = vand.u32 %v171, 4294901760
    %173 = vmatpush.msra.mxu0 %v172
    %v174 = vand.u32 %v95, 4294901760
    %v175 = vsub.f32 %v95, %v174
    %v176 = vand.u32 %v175, 4294901760
    %v177 = vsub.f32 %v175, %v176
    %v178 = vand.u32 %v177, 4294901760
    %179 = vmatpush.msra.mxu0 %v178
    %v180 = vand.u32 %v94, 4294901760
    %v181 = vsub.f32 %v94, %v180
    %v182 = vand.u32 %v181, 4294901760
    %v183 = vsub.f32 %v181, %v182
    %v184 = vand.u32 %v183, 4294901760
    %185 = vmatpush.msra.mxu0 %v184
    %v186 = vand.u32 %v93, 4294901760
    %v187 = vsub.f32 %v93, %v186
    %v188 = vand.u32 %v187, 4294901760
    %v189 = vsub.f32 %v187, %v188
    %v190 = vand.u32 %v189, 4294901760
    %191 = vmatpush.msra.mxu0 %v190
    %v192 = vand.u32 %v92, 4294901760
    %v193 = vsub.f32 %v92, %v192
    %v194 = vand.u32 %v193, 4294901760
    %v195 = vsub.f32 %v193, %v194
    %v196 = vand.u32 %v195, 4294901760
    %197 = vmatpush.msra.mxu0 %v196
    %v198 = vand.u32 %v91, 4294901760
    %v199 = vsub.f32 %v91, %v198
    %v200 = vand.u32 %v199, 4294901760
    %v201 = vsub.f32 %v199, %v200
    %v202 = vand.u32 %v201, 4294901760
    %203 = vmatpush.msra.mxu0 %v202
    %v204 = vand.u32 %v90, 4294901760
    %v205 = vsub.f32 %v90, %v204
    %v206 = vand.u32 %v205, 4294901760
    %v207 = vsub.f32 %v205, %v206
    %v208 = vand.u32 %v207, 4294901760
    %209 = vmatpush.msra.mxu0 %v208
    %v210 = vand.u32 %v89, 4294901760
    %v211 = vsub.f32 %v89, %v210
    %v212 = vand.u32 %v211, 4294901760
    %v213 = vsub.f32 %v211, %v212
    %v214 = vand.u32 %v213, 4294901760
    %215 = vmatpush.msra.mxu0 %v214
    %v216 = vand.u32 %v88, 4294901760
    %v217 = vsub.f32 %v88, %v216
    %v218 = vand.u32 %v217, 4294901760
    %v219 = vsub.f32 %v217, %v218
    %v220 = vand.u32 %v219, 4294901760
    %221 = vmatpush.msra.mxu0 %v220
    %v222 = vand.u32 %v87, 4294901760
    %v223 = vsub.f32 %v87, %v222
    %v224 = vand.u32 %v223, 4294901760
    %v225 = vsub.f32 %v223, %v224
    %v226 = vand.u32 %v225, 4294901760
    %227 = vmatpush.msra.mxu0 %v226
    %v228 = vand.u32 %v86, 4294901760
    %v229 = vsub.f32 %v86, %v228
    %v230 = vand.u32 %v229, 4294901760
    %v231 = vsub.f32 %v229, %v230
    %v232 = vand.u32 %v231, 4294901760
    %233 = vmatpush.msra.mxu0 %v232
    %v234 = vand.u32 %v85, 4294901760
    %v235 = vsub.f32 %v85, %v234
    %v236 = vand.u32 %v235, 4294901760
    %v237 = vsub.f32 %v235, %v236
    %v238 = vand.u32 %v237, 4294901760
    %239 = vmatpush.msra.mxu0 %v238
    %v240 = vand.u32 %v84, 4294901760
    %v241 = vsub.f32 %v84, %v240
    %v242 = vand.u32 %v241, 4294901760
    %v243 = vsub.f32 %v241, %v242
    %v244 = vand.u32 %v243, 4294901760
    %245 = vmatpush.msra.mxu0 %v244
    %v246 = vand.u32 %v83, 4294901760
    %v247 = vsub.f32 %v83, %v246
    %v248 = vand.u32 %v247, 4294901760
    %v249 = vsub.f32 %v247, %v248
    %v250 = vand.u32 %v249, 4294901760
    %251 = vmatpush.msra.mxu0 %v250
    %v252 = vand.u32 %v80, 4294901760
    %253 = vmatmul.f32.gmra.mxu0 %v252
    %v254 = vpop.f32.mrf.mxu0
    %v255 = vadd.f32 %v138, %v254
    %v256 = vand.u32 %v81, 4294901760
    %257 = vmatmul.f32.gmra.mxu0 %v256
    %v258 = vpop.f32.mrf.mxu0
    %v259 = vadd.f32 %v146, %v258
    %v260 = vand.u32 %v82, 4294901760
    %261 = vmatmul.f32.gmra.mxu0 %v260
    %v262 = vpop.f32.mrf.mxu0
    %v263 = vadd.f32 %v154, %v262
    %264 = vdwg.mxu0
    %v265 = vand.u32 %v98, 4294901760
    %v266 = vsub.f32 %v98, %v265
    %267 = vmatpush.msra.mxu0 %v266
    %v268 = vand.u32 %v97, 4294901760
    %v269 = vsub.f32 %v97, %v268
    %270 = vmatpush.msra.mxu0 %v269
    %v271 = vand.u32 %v96, 4294901760
    %v272 = vsub.f32 %v96, %v271
    %273 = vmatpush.msra.mxu0 %v272
    %v274 = vand.u32 %v95, 4294901760
    %v275 = vsub.f32 %v95, %v274
    %276 = vmatpush.msra.mxu0 %v275
    %v277 = vand.u32 %v94, 4294901760
    %v278 = vsub.f32 %v94, %v277
    %279 = vmatpush.msra.mxu0 %v278
    %v280 = vand.u32 %v93, 4294901760
    %v281 = vsub.f32 %v93, %v280
    %282 = vmatpush.msra.mxu0 %v281
    %v283 = vand.u32 %v92, 4294901760
    %v284 = vsub.f32 %v92, %v283
    %285 = vmatpush.msra.mxu0 %v284
    %v286 = vand.u32 %v91, 4294901760
    %v287 = vsub.f32 %v91, %v286
    %288 = vmatpush.msra.mxu0 %v287
    %v289 = vand.u32 %v90, 4294901760
    %v290 = vsub.f32 %v90, %v289
    %291 = vmatpush.msra.mxu0 %v290
    %v292 = vand.u32 %v89, 4294901760
    %v293 = vsub.f32 %v89, %v292
    %294 = vmatpush.msra.mxu0 %v293
    %v295 = vand.u32 %v88, 4294901760
    %v296 = vsub.f32 %v88, %v295
    %297 = vmatpush.msra.mxu0 %v296
    %v298 = vand.u32 %v87, 4294901760
    %v299 = vsub.f32 %v87, %v298
    %300 = vmatpush.msra.mxu0 %v299
    %v301 = vand.u32 %v86, 4294901760
    %v302 = vsub.f32 %v86, %v301
    %303 = vmatpush.msra.mxu0 %v302
    %v304 = vand.u32 %v85, 4294901760
    %v305 = vsub.f32 %v85, %v304
    %306 = vmatpush.msra.mxu0 %v305
    %v307 = vand.u32 %v84, 4294901760
    %v308 = vsub.f32 %v84, %v307
    %309 = vmatpush.msra.mxu0 %v308
    %v310 = vand.u32 %v83, 4294901760
    %v311 = vsub.f32 %v83, %v310
    %312 = vmatpush.msra.mxu0 %v311
    %v313 = vand.u32 %v80, 4294901760
    %v314 = vsub.f32 %v80, %v313
    %315 = vmatmul.f32.gmra.mxu0 %v314
    %v316 = vpop.f32.mrf.mxu0
    %v317 = vadd.f32 %v255, %v316
    %v318 = vand.u32 %v81, 4294901760
    %v319 = vsub.f32 %v81, %v318
    %320 = vmatmul.f32.gmra.mxu0 %v319
    %v321 = vpop.f32.mrf.mxu0
    %v322 = vadd.f32 %v259, %v321
    %v323 = vand.u32 %v82, 4294901760
    %v324 = vsub.f32 %v82, %v323
    %325 = vmatmul.f32.gmra.mxu0 %v324
    %v326 = vpop.f32.mrf.mxu0
    %v327 = vadd.f32 %v263, %v326
    %328 = vdwg.mxu0
    %v329 = vand.u32 %v98, 4294901760
    %330 = vmatpush.msra.mxu0 %v329
    %v331 = vand.u32 %v97, 4294901760
    %332 = vmatpush.msra.mxu0 %v331
    %v333 = vand.u32 %v96, 4294901760
    %334 = vmatpush.msra.mxu0 %v333
    %v335 = vand.u32 %v95, 4294901760
    %336 = vmatpush.msra.mxu0 %v335
    %v337 = vand.u32 %v94, 4294901760
    %338 = vmatpush.msra.mxu0 %v337
    %v339 = vand.u32 %v93, 4294901760
    %340 = vmatpush.msra.mxu0 %v339
    %v341 = vand.u32 %v92, 4294901760
    %342 = vmatpush.msra.mxu0 %v341
    %v343 = vand.u32 %v91, 4294901760
    %344 = vmatpush.msra.mxu0 %v343
    %v345 = vand.u32 %v90, 4294901760
    %346 = vmatpush.msra.mxu0 %v345
    %v347 = vand.u32 %v89, 4294901760
    %348 = vmatpush.msra.mxu0 %v347
    %v349 = vand.u32 %v88, 4294901760
    %350 = vmatpush.msra.mxu0 %v349
    %v351 = vand.u32 %v87, 4294901760
    %352 = vmatpush.msra.mxu0 %v351
    %v353 = vand.u32 %v86, 4294901760
    %354 = vmatpush.msra.mxu0 %v353
    %v355 = vand.u32 %v85, 4294901760
    %356 = vmatpush.msra.mxu0 %v355
    %v357 = vand.u32 %v84, 4294901760
    %358 = vmatpush.msra.mxu0 %v357
    %v359 = vand.u32 %v83, 4294901760
    %360 = vmatpush.msra.mxu0 %v359
    %v361 = vand.u32 %v80, 4294901760
    %v362 = vsub.f32 %v80, %v361
    %v363 = vand.u32 %v362, 4294901760
    %364 = vmatmul.f32.gmra.mxu0 %v363
    %v365 = vpop.f32.mrf.mxu0
    %v366 = vadd.f32 %v317, %v365
    %v367 = vand.u32 %v81, 4294901760
    %v368 = vsub.f32 %v81, %v367
    %v369 = vand.u32 %v368, 4294901760
    %370 = vmatmul.f32.gmra.mxu0 %v369
    %v371 = vpop.f32.mrf.mxu0
    %v372 = vadd.f32 %v322, %v371
    %v373 = vand.u32 %v82, 4294901760
    %v374 = vsub.f32 %v82, %v373
    %v375 = vand.u32 %v374, 4294901760
    %376 = vmatmul.f32.gmra.mxu0 %v375
    %v377 = vpop.f32.mrf.mxu0
    %v378 = vadd.f32 %v327, %v377
    %379 = vdwg.mxu0
    %v380 = vand.u32 %v98, 4294901760
    %v381 = vsub.f32 %v98, %v380
    %v382 = vand.u32 %v381, 4294901760
    %383 = vmatpush.msra.mxu0 %v382
    %v384 = vand.u32 %v97, 4294901760
    %v385 = vsub.f32 %v97, %v384
    %v386 = vand.u32 %v385, 4294901760
    %387 = vmatpush.msra.mxu0 %v386
    %v388 = vand.u32 %v96, 4294901760
    %v389 = vsub.f32 %v96, %v388
    %v390 = vand.u32 %v389, 4294901760
    %391 = vmatpush.msra.mxu0 %v390
    %v392 = vand.u32 %v95, 4294901760
    %v393 = vsub.f32 %v95, %v392
    %v394 = vand.u32 %v393, 4294901760
    %395 = vmatpush.msra.mxu0 %v394
    %v396 = vand.u32 %v94, 4294901760
    %v397 = vsub.f32 %v94, %v396
    %v398 = vand.u32 %v397, 4294901760
    %399 = vmatpush.msra.mxu0 %v398
    %v400 = vand.u32 %v93, 4294901760
    %v401 = vsub.f32 %v93, %v400
    %v402 = vand.u32 %v401, 4294901760
    %403 = vmatpush.msra.mxu0 %v402
    %v404 = vand.u32 %v92, 4294901760
    %v405 = vsub.f32 %v92, %v404
    %v406 = vand.u32 %v405, 4294901760
    %407 = vmatpush.msra.mxu0 %v406
    %v408 = vand.u32 %v91, 4294901760
    %v409 = vsub.f32 %v91, %v408
    %v410 = vand.u32 %v409, 4294901760
    %411 = vmatpush.msra.mxu0 %v410
    %v412 = vand.u32 %v90, 4294901760
    %v413 = vsub.f32 %v90, %v412
    %v414 = vand.u32 %v413, 4294901760
    %415 = vmatpush.msra.mxu0 %v414
    %v416 = vand.u32 %v89, 4294901760
    %v417 = vsub.f32 %v89, %v416
    %v418 = vand.u32 %v417, 4294901760
    %419 = vmatpush.msra.mxu0 %v418
    %v420 = vand.u32 %v88, 4294901760
    %v421 = vsub.f32 %v88, %v420
    %v422 = vand.u32 %v421, 4294901760
    %423 = vmatpush.msra.mxu0 %v422
    %v424 = vand.u32 %v87, 4294901760
    %v425 = vsub.f32 %v87, %v424
    %v426 = vand.u32 %v425, 4294901760
    %427 = vmatpush.msra.mxu0 %v426
    %v428 = vand.u32 %v86, 4294901760
    %v429 = vsub.f32 %v86, %v428
    %v430 = vand.u32 %v429, 4294901760
    %431 = vmatpush.msra.mxu0 %v430
    %v432 = vand.u32 %v85, 4294901760
    %v433 = vsub.f32 %v85, %v432
    %v434 = vand.u32 %v433, 4294901760
    %435 = vmatpush.msra.mxu0 %v434
    %v436 = vand.u32 %v84, 4294901760
    %v437 = vsub.f32 %v84, %v436
    %v438 = vand.u32 %v437, 4294901760
    %439 = vmatpush.msra.mxu0 %v438
    %v440 = vand.u32 %v83, 4294901760
    %v441 = vsub.f32 %v83, %v440
    %v442 = vand.u32 %v441, 4294901760
    %443 = vmatpush.msra.mxu0 %v442
    %v444 = vand.u32 %v80, 4294901760
    %445 = vmatmul.f32.gmra.mxu0 %v444
    %v446 = vpop.f32.mrf.mxu0
    %v447 = vadd.f32 %v366, %v446
    %v448 = vand.u32 %v81, 4294901760
    %449 = vmatmul.f32.gmra.mxu0 %v448
    %v450 = vpop.f32.mrf.mxu0
    %v451 = vadd.f32 %v372, %v450
    %v452 = vand.u32 %v82, 4294901760
    %453 = vmatmul.f32.gmra.mxu0 %v452
    %v454 = vpop.f32.mrf.mxu0
    %v455 = vadd.f32 %v378, %v454
    %456 = vdwg.mxu0
    %v457 = vand.u32 %v98, 4294901760
    %458 = vmatpush.msra.mxu0 %v457
    %v459 = vand.u32 %v97, 4294901760
    %460 = vmatpush.msra.mxu0 %v459
    %v461 = vand.u32 %v96, 4294901760
    %462 = vmatpush.msra.mxu0 %v461
    %v463 = vand.u32 %v95, 4294901760
    %464 = vmatpush.msra.mxu0 %v463
    %v465 = vand.u32 %v94, 4294901760
    %466 = vmatpush.msra.mxu0 %v465
    %v467 = vand.u32 %v93, 4294901760
    %468 = vmatpush.msra.mxu0 %v467
    %v469 = vand.u32 %v92, 4294901760
    %470 = vmatpush.msra.mxu0 %v469
    %v471 = vand.u32 %v91, 4294901760
    %472 = vmatpush.msra.mxu0 %v471
    %v473 = vand.u32 %v90, 4294901760
    %474 = vmatpush.msra.mxu0 %v473
    %v475 = vand.u32 %v89, 4294901760
    %476 = vmatpush.msra.mxu0 %v475
    %v477 = vand.u32 %v88, 4294901760
    %478 = vmatpush.msra.mxu0 %v477
    %v479 = vand.u32 %v87, 4294901760
    %480 = vmatpush.msra.mxu0 %v479
    %v481 = vand.u32 %v86, 4294901760
    %482 = vmatpush.msra.mxu0 %v481
    %v483 = vand.u32 %v85, 4294901760
    %484 = vmatpush.msra.mxu0 %v483
    %v485 = vand.u32 %v84, 4294901760
    %486 = vmatpush.msra.mxu0 %v485
    %v487 = vand.u32 %v83, 4294901760
    %488 = vmatpush.msra.mxu0 %v487
    %v489 = vand.u32 %v80, 4294901760
    %490 = vmatmul.f32.gmra.mxu0 %v489
    %v491 = vpop.f32.mrf.mxu0
    %v492 = vadd.f32 %v447, %v491
    %v493 = vand.u32 %v81, 4294901760
    %494 = vmatmul.f32.gmra.mxu0 %v493
    %v495 = vpop.f32.mrf.mxu0
    %v496 = vadd.f32 %v451, %v495
    %v497 = vand.u32 %v82, 4294901760
    %498 = vmatmul.f32.gmra.mxu0 %v497
    %v499 = vpop.f32.mrf.mxu0
    %v500 = vadd.f32 %v455, %v499
    %501 = vdwg.mxu0
    %502 = vst [vmem:[#allocation7] sm:$0xff] %v492
    %503 = vst [vmem:[#allocation7 + $0x8] sm:$0xff] %v496
    %504 = vst [vmem:[#allocation7 + $0x10] sm:$0xff] %v500
    // Predicated region
    $region18: #{tpu_custom_call.1} parent=1 // pred_check
      _
    $region19: #{tpu_custom_call.1} parent=1 // pred_check_branch
      %506 = sbr.rel (0) target = $region21
    $region20: #{tpu_custom_call.1} parent=1 // pred_region
      %508 = vsyncadd [#allocation4], 0
      %s509 = sshll.u32 [#allocation7], 4
      %s510 = int_to_ptr.vmem [resolvable:$true] %s509
      %s511 = sshll.u32 %s2, 4
      %s512 = int_to_ptr.hbm [resolvable:$true] %s511
      %517 = dma.vmem_to_hbm [thread:$0]  %s510, 384, %s512, [#allocation4], 128, 128, 8
    $region21: #{tpu_custom_call.1} parent=1 // pred_fallthru
      _
    // Predicated region
    $region22: #{tpu_custom_call.1} parent=1 // pred_check
      _
    $region23: #{tpu_custom_call.1} parent=1 // pred_check_branch
      %519 = sbr.rel (0) target = $region25
    $region24: #{tpu_custom_call.1} parent=1 // pred_region
      %521 = dma.done [#allocation4], 384
    $region25: #{tpu_custom_call.1} parent=1 // pred_fallthru
      _
    %522 = vsyncpa [#allocation3], 1
    %523 = vsyncpa [#allocation6], 1
    %524 = vsyncpa [#allocation4], 1

</llo_original>
